<compile_context>
chip_gen: v5e
topology: v5e:2x2
jax: 0.10.0
libtpu: 0.0.40
codegen_flags: <defaults>
</compile_context>

<pallas_src>
import jax
import jax.numpy as jnp
from jax.experimental import pallas as pl
from jax.experimental.pallas import tpu as pltpu


def esa_kernel(x_ref, wq_ref, bq_ref, wk_ref, bk_ref, wv_ref, bv_ref, gamma_ref, o_ref):
    # x_ref: (1, C, L)   wq/wk: (Ck, C)   wv: (C, C)   b*: (Co, 1)   gamma: (1,) in SMEM
    x = x_ref[0]                                                          # (C, L)

    # key = softmax over L of (Wk x + bk)                                  (Ck, L)
    k = jnp.dot(wk_ref[...], x, preferred_element_type=jnp.float32) + bk_ref[...]
    k = jnp.exp(k - jnp.max(k, axis=1, keepdims=True))
    k = k * pl.reciprocal(jnp.sum(k, axis=1, keepdims=True), approx=False)

    # value = Wv x + bv                                                    (C, L)
    v = jnp.dot(wv_ref[...], x, preferred_element_type=jnp.float32) + bv_ref[...]

    # context = key @ value^T                                              (Ck, C)
    context = jnp.dot(k, v.T, preferred_element_type=jnp.float32)

    # query = softmax over channel axis of (Wq x + bq)                     (Ck, L)
    q = jnp.dot(wq_ref[...], x, preferred_element_type=jnp.float32) + bq_ref[...]
    q = jnp.exp(q - jnp.max(q, axis=0, keepdims=True))
    q = q * pl.reciprocal(jnp.sum(q, axis=0, keepdims=True), approx=False)

    # attention = context^T @ query ; out = gamma * attention + x          (C, L)
    attn = jnp.dot(context.T, q, preferred_element_type=jnp.float32)
    o_ref[0] = gamma_ref[0] * attn + x


def efficient_self_attention_forward(x, wq, bq, wk, bk, wv, bv, gamma):
    """x: (B, C, T, H, W); wq/wk: (C//8, C, 1, 1, 1); wv: (C, C, 1, 1, 1); b*: (Cout,)."""
    B, C, T, H, W = x.shape
    Ck = wq.shape[0]
    L = T * H * W

    xf = x.reshape(B, C, L).astype(jnp.float32)
    wq2 = wq.reshape(Ck, C).astype(jnp.float32)
    wk2 = wk.reshape(Ck, C).astype(jnp.float32)
    wv2 = wv.reshape(C, C).astype(jnp.float32)
    bq2 = bq.reshape(Ck, 1).astype(jnp.float32)
    bk2 = bk.reshape(Ck, 1).astype(jnp.float32)
    bv2 = bv.reshape(C, 1).astype(jnp.float32)
    g = jnp.asarray(gamma, jnp.float32).reshape(1)

    out = pl.pallas_call(
        esa_kernel,
        out_shape=jax.ShapeDtypeStruct((B, C, L), jnp.float32),
        grid=(B,),
        in_specs=[
            pl.BlockSpec((1, C, L), lambda b: (b, 0, 0)),     # x slab for this sample
            pl.BlockSpec((Ck, C), lambda b: (0, 0)),          # Wq
            pl.BlockSpec((Ck, 1), lambda b: (0, 0)),          # bq
            pl.BlockSpec((Ck, C), lambda b: (0, 0)),          # Wk
            pl.BlockSpec((Ck, 1), lambda b: (0, 0)),          # bk
            pl.BlockSpec((C, C), lambda b: (0, 0)),           # Wv
            pl.BlockSpec((C, 1), lambda b: (0, 0)),           # bv
            pl.BlockSpec(memory_space=pltpu.MemorySpace.SMEM),  # gamma scalar
        ],
        out_specs=pl.BlockSpec((1, C, L), lambda b: (b, 0, 0)),
        compiler_params=pltpu.CompilerParams(dimension_semantics=("parallel",)),
    )(xf, wq2, bq2, wk2, bk2, wv2, bv2, g)

    return out.reshape(B, C, T, H, W)


def reference_forward(x, wq, bq, wk, bk, wv, bv, gamma):
    """Pure-JAX reference matching the PyTorch module's forward."""
    B, C, T, H, W = x.shape
    Ck = wq.shape[0]
    L = T * H * W
    xf = x.reshape(B, C, L)

    def pw(w, b_, co):
        y = jnp.einsum("oc,bcl->bol", w.reshape(co, C), xf, precision="highest")
        return y + b_.reshape(1, co, 1)

    key = jax.nn.softmax(pw(wk, bk, Ck), axis=2)
    value = pw(wv, bv, C)
    context = jnp.einsum("bkl,bcl->bkc", key, value, precision="highest")
    query = jax.nn.softmax(pw(wq, bq, Ck), axis=1)
    attention = jnp.einsum("bkc,bkl->bcl", context, query, precision="highest")
    out = gamma * attention + xf
    return out.reshape(B, C, T, H, W)


if __name__ == "__main__":
    key = jax.random.PRNGKey(0)
    kx, kq, kqb, kk, kkb, kv, kvb = jax.random.split(key, 7)

    B, C, T, H, W = 2, 32, 4, 8, 8          # in_channels=32 -> q/k channels = 4, L = 256
    Ck = C // 8
    x = jax.random.normal(kx, (B, C, T, H, W), dtype=jnp.float32)
    wq = jax.random.normal(kq, (Ck, C, 1, 1, 1), dtype=jnp.float32) * 0.2
    bq = jax.random.normal(kqb, (Ck,), dtype=jnp.float32) * 0.1
    wk = jax.random.normal(kk, (Ck, C, 1, 1, 1), dtype=jnp.float32) * 0.2
    bk = jax.random.normal(kkb, (Ck,), dtype=jnp.float32) * 0.1
    wv = jax.random.normal(kv, (C, C, 1, 1, 1), dtype=jnp.float32) * 0.2
    bv = jax.random.normal(kvb, (C,), dtype=jnp.float32) * 0.1
    # Module initializes gamma = 0 (output == input); use a nonzero value here so the
    # attention path is actually exercised by the check.
    gamma = jnp.float32(0.7)

    out = jax.block_until_ready(
        efficient_self_attention_forward(x, wq, bq, wk, bk, wv, bv, gamma))
    assert out.shape == (B, C, T, H, W), out.shape

    ref = jax.block_until_ready(reference_forward(x, wq, bq, wk, bk, wv, bv, gamma))
    assert jnp.allclose(out, ref, atol=1e-3, rtol=1e-3), \
        float(jnp.max(jnp.abs(out - ref)))

    print("KERNEL_OK")
</pallas_src>

<mosaic_0001>
module attributes {stable_mosaic.version = 11 : i64} {
  func.func @esa_kernel(%arg0: i32, %arg1: memref<1x32x256xf32, #tpu.memory_space<vmem>>, %arg2: memref<4x32xf32, #tpu.memory_space<vmem>>, %arg3: memref<4x1xf32, #tpu.memory_space<vmem>>, %arg4: memref<4x32xf32, #tpu.memory_space<vmem>>, %arg5: memref<4x1xf32, #tpu.memory_space<vmem>>, %arg6: memref<32x32xf32, #tpu.memory_space<vmem>>, %arg7: memref<32x1xf32, #tpu.memory_space<vmem>>, %arg8: memref<1xf32, #tpu.memory_space<smem>>, %arg9: memref<1x32x256xf32, #tpu.memory_space<vmem>>) attributes {dimension_semantics = [#tpu.dimension_semantics<parallel>], iteration_bounds = array<i64: 2>, scalar_prefetch = 0 : i64, scratch_operands = 0 : i64, tpu.core_type = #tpu.core_type<tc>, window_params = [{transform_indices = @transform_0, window_bounds = array<i64: 1, 32, 256>}, {pipeline_mode = #tpu.pipeline_mode<synchronous>, transform_indices = @transform_1, window_bounds = array<i64: 4, 32>}, {pipeline_mode = #tpu.pipeline_mode<synchronous>, transform_indices = @transform_2, window_bounds = array<i64: 4, 1>}, {pipeline_mode = #tpu.pipeline_mode<synchronous>, transform_indices = @transform_3, window_bounds = array<i64: 4, 32>}, {pipeline_mode = #tpu.pipeline_mode<synchronous>, transform_indices = @transform_4, window_bounds = array<i64: 4, 1>}, {pipeline_mode = #tpu.pipeline_mode<synchronous>, transform_indices = @transform_5, window_bounds = array<i64: 32, 32>}, {pipeline_mode = #tpu.pipeline_mode<synchronous>, transform_indices = @transform_6, window_bounds = array<i64: 32, 1>}, {transform_indices = @transform_7, window_bounds = array<i64: 1>}, {transform_indices = @transform_8, window_bounds = array<i64: 1, 32, 256>}]} {
    %c0 = arith.constant 0 : index
    %c0_0 = arith.constant 0 : index
    %c0_1 = arith.constant 0 : index
    %0 = vector.load %arg1[%c0, %c0_0, %c0_1] : memref<1x32x256xf32, #tpu.memory_space<vmem>>, vector<1x32x256xf32>
    %1 = vector.shape_cast %0 : vector<1x32x256xf32> to vector<32x256xf32>
    %c0_2 = arith.constant 0 : index
    %c0_3 = arith.constant 0 : index
    %2 = vector.load %arg4[%c0_2, %c0_3] : memref<4x32xf32, #tpu.memory_space<vmem>>, vector<4x32xf32>
    %cst = arith.constant dense<0.000000e+00> : vector<4x256xf32>
    %3 = tpu.matmul %2, %1, %cst {dimension_numbers = #tpu.dot_dimension_numbers<[1], [0], [0], [1], [0, 0, 1, 1], [], []>} : vector<4x32xf32>, vector<32x256xf32>, vector<4x256xf32> -> vector<4x256xf32>
    %c0_4 = arith.constant 0 : index
    %c0_5 = arith.constant 0 : index
    %4 = vector.load %arg5[%c0_4, %c0_5] : memref<4x1xf32, #tpu.memory_space<vmem>>, vector<4x1xf32>
    %5 = vector.broadcast %4 : vector<4x1xf32> to vector<4x256xf32>
    %6 = arith.addf %3, %5 : vector<4x256xf32>
    %cst_6 = arith.constant dense<0xFF800000> : vector<4xf32>
    %7 = vector.multi_reduction <maximumf>, %6, %cst_6 [1] : vector<4x256xf32> to vector<4xf32>
    %8 = vector.shape_cast %7 : vector<4xf32> to vector<4x1xf32>
    %9 = vector.broadcast %8 : vector<4x1xf32> to vector<4x256xf32>
    %10 = arith.subf %6, %9 : vector<4x256xf32>
    %11 = math.exp %10 : vector<4x256xf32>
    %cst_7 = arith.constant dense<0.000000e+00> : vector<4xf32>
    %12 = vector.multi_reduction <add>, %11, %cst_7 [1] : vector<4x256xf32> to vector<4xf32>
    %13 = vector.shape_cast %12 : vector<4xf32> to vector<4x1xf32>
    %14 = tpu.reciprocal %13 : vector<4x1xf32> -> vector<4x1xf32>
    %15 = vector.broadcast %14 : vector<4x1xf32> to vector<4x256xf32>
    %16 = arith.mulf %11, %15 : vector<4x256xf32>
    %c0_8 = arith.constant 0 : index
    %c0_9 = arith.constant 0 : index
    %17 = vector.load %arg6[%c0_8, %c0_9] : memref<32x32xf32, #tpu.memory_space<vmem>>, vector<32x32xf32>
    %cst_10 = arith.constant dense<0.000000e+00> : vector<32x256xf32>
    %18 = tpu.matmul %17, %1, %cst_10 {dimension_numbers = #tpu.dot_dimension_numbers<[1], [0], [0], [1], [0, 0, 1, 1], [], []>} : vector<32x32xf32>, vector<32x256xf32>, vector<32x256xf32> -> vector<32x256xf32>
    %c0_11 = arith.constant 0 : index
    %c0_12 = arith.constant 0 : index
    %19 = vector.load %arg7[%c0_11, %c0_12] : memref<32x1xf32, #tpu.memory_space<vmem>>, vector<32x1xf32>
    %20 = vector.broadcast %19 : vector<32x1xf32> to vector<32x256xf32>
    %21 = arith.addf %18, %20 : vector<32x256xf32>
    %22 = tpu.transpose %21, [1, 0] : vector<32x256xf32> -> vector<256x32xf32>
    %cst_13 = arith.constant dense<0.000000e+00> : vector<4x32xf32>
    %23 = tpu.matmul %16, %22, %cst_13 {dimension_numbers = #tpu.dot_dimension_numbers<[1], [0], [0], [1], [0, 0, 1, 1], [], []>} : vector<4x256xf32>, vector<256x32xf32>, vector<4x32xf32> -> vector<4x32xf32>
    %c0_14 = arith.constant 0 : index
    %c0_15 = arith.constant 0 : index
    %24 = vector.load %arg2[%c0_14, %c0_15] : memref<4x32xf32, #tpu.memory_space<vmem>>, vector<4x32xf32>
    %cst_16 = arith.constant dense<0.000000e+00> : vector<4x256xf32>
    %25 = tpu.matmul %24, %1, %cst_16 {dimension_numbers = #tpu.dot_dimension_numbers<[1], [0], [0], [1], [0, 0, 1, 1], [], []>} : vector<4x32xf32>, vector<32x256xf32>, vector<4x256xf32> -> vector<4x256xf32>
    %c0_17 = arith.constant 0 : index
    %c0_18 = arith.constant 0 : index
    %26 = vector.load %arg3[%c0_17, %c0_18] : memref<4x1xf32, #tpu.memory_space<vmem>>, vector<4x1xf32>
    %27 = vector.broadcast %26 : vector<4x1xf32> to vector<4x256xf32>
    %28 = arith.addf %25, %27 : vector<4x256xf32>
    %cst_19 = arith.constant dense<0xFF800000> : vector<256xf32>
    %29 = vector.multi_reduction <maximumf>, %28, %cst_19 [0] : vector<4x256xf32> to vector<256xf32>
    %30 = vector.shape_cast %29 : vector<256xf32> to vector<1x256xf32>
    %31 = vector.broadcast %30 : vector<1x256xf32> to vector<4x256xf32>
    %32 = arith.subf %28, %31 : vector<4x256xf32>
    %33 = math.exp %32 : vector<4x256xf32>
    %cst_20 = arith.constant dense<0.000000e+00> : vector<256xf32>
    %34 = vector.multi_reduction <add>, %33, %cst_20 [0] : vector<4x256xf32> to vector<256xf32>
    %35 = vector.shape_cast %34 : vector<256xf32> to vector<1x256xf32>
    %36 = tpu.reciprocal %35 : vector<1x256xf32> -> vector<1x256xf32>
    %37 = vector.broadcast %36 : vector<1x256xf32> to vector<4x256xf32>
    %38 = arith.mulf %33, %37 : vector<4x256xf32>
    %39 = tpu.transpose %23, [1, 0] : vector<4x32xf32> -> vector<32x4xf32>
    %cst_21 = arith.constant dense<0.000000e+00> : vector<32x256xf32>
    %40 = tpu.matmul %39, %38, %cst_21 {dimension_numbers = #tpu.dot_dimension_numbers<[1], [0], [0], [1], [0, 0, 1, 1], [], []>} : vector<32x4xf32>, vector<4x256xf32>, vector<32x256xf32> -> vector<32x256xf32>
    %c0_22 = arith.constant 0 : index
    %41 = memref.load %arg8[%c0_22] : memref<1xf32, #tpu.memory_space<smem>>
    %42 = vector.broadcast %41 : f32 to vector<32x256xf32>
    %43 = arith.mulf %42, %40 : vector<32x256xf32>
    %44 = arith.addf %43, %1 : vector<32x256xf32>
    %c0_23 = arith.constant 0 : index
    %c0_24 = arith.constant 0 : index
    %c0_25 = arith.constant 0 : index
    %45 = vector.load %arg9[%c0_23, %c0_24, %c0_25] : memref<1x32x256xf32, #tpu.memory_space<vmem>>, vector<1x32x256xf32>
    %46 = vector.shape_cast %45 : vector<1x32x256xf32> to vector<32x256xf32>
    %47 = vector.shape_cast %44 : vector<32x256xf32> to vector<1x32x256xf32>
    tpu.vector_store %arg9[%c0_23, %c0_24, %c0_25], %47 {strides = array<i32>} : memref<1x32x256xf32, #tpu.memory_space<vmem>>, vector<1x32x256xf32>,
    return
  }
  func.func @transform_0(%arg0: i32) -> (i32, i32, i32) {
    %c0_i32 = arith.constant 0 : i32
    %c0_i32_0 = arith.constant 0 : i32
    %c0_i32_1 = arith.constant 0 : i32
    return %arg0, %c0_i32, %c0_i32_0 : i32, i32, i32
  }
  func.func @transform_1(%arg0: i32) -> (i32, i32) {
    %c0_i32 = arith.constant 0 : i32
    %c0_i32_0 = arith.constant 0 : i32
    %c0_i32_1 = arith.constant 0 : i32
    return %c0_i32, %c0_i32_0 : i32, i32
  }
  func.func @transform_2(%arg0: i32) -> (i32, i32) {
    %c0_i32 = arith.constant 0 : i32
    %c0_i32_0 = arith.constant 0 : i32
    %c0_i32_1 = arith.constant 0 : i32
    return %c0_i32, %c0_i32_0 : i32, i32
  }
  func.func @transform_3(%arg0: i32) -> (i32, i32) {
    %c0_i32 = arith.constant 0 : i32
    %c0_i32_0 = arith.constant 0 : i32
    %c0_i32_1 = arith.constant 0 : i32
    return %c0_i32, %c0_i32_0 : i32, i32
  }
  func.func @transform_4(%arg0: i32) -> (i32, i32) {
    %c0_i32 = arith.constant 0 : i32
    %c0_i32_0 = arith.constant 0 : i32
    %c0_i32_1 = arith.constant 0 : i32
    return %c0_i32, %c0_i32_0 : i32, i32
  }
  func.func @transform_5(%arg0: i32) -> (i32, i32) {
    %c0_i32 = arith.constant 0 : i32
    %c0_i32_0 = arith.constant 0 : i32
    %c0_i32_1 = arith.constant 0 : i32
    return %c0_i32, %c0_i32_0 : i32, i32
  }
  func.func @transform_6(%arg0: i32) -> (i32, i32) {
    %c0_i32 = arith.constant 0 : i32
    %c0_i32_0 = arith.constant 0 : i32
    %c0_i32_1 = arith.constant 0 : i32
    return %c0_i32, %c0_i32_0 : i32, i32
  }
  func.func @transform_7(%arg0: i32) -> i32 {
    %c0_i32 = arith.constant 0 : i32
    %c0_i32_0 = arith.constant 0 : i32
    return %c0_i32 : i32
  }
  func.func @transform_8(%arg0: i32) -> (i32, i32, i32) {
    %c0_i32 = arith.constant 0 : i32
    %c0_i32_0 = arith.constant 0 : i32
    %c0_i32_1 = arith.constant 0 : i32
    return %arg0, %c0_i32, %c0_i32_0 : i32, i32, i32
  }
}

</mosaic_0001>

<llo_original>
// kernel: tpu_custom_call.1
$region0: #{tpu_custom_call.1}
  #allocation0 [shape = 'u32[]', space=smem, size = 0x4, offset = 0x4, fixed_abs, tag = 'smem constant byte address 0x4 - core index']
  #allocation1 [shape = 'u32[72,128]{1,0:T(1,128)}', space=vmem, size = 0x9000, scoped, tag = 'internal scratch']
  #allocation2 [shape = 'f32[1]{0:T(128)S(6)}', space=smem, size = 0x200, scoped, tag = 'scoped memory for tpu_custom_call.1']
  %s0 = inlined_call_operand.hbm [shape: f32[2,32,256], index: 0, kind: input, shape index: {}]
  %s1 = inlined_call_operand.vmem [shape: f32[4,32], index: 1, kind: input, shape index: {}]
  %s2 = inlined_call_operand.vmem [shape: f32[4,1], index: 2, kind: input, shape index: {}]
  %s3 = inlined_call_operand.vmem [shape: f32[4,32], index: 3, kind: input, shape index: {}]
  %s4 = inlined_call_operand.vmem [shape: f32[4,1], index: 4, kind: input, shape index: {}]
  %s5 = inlined_call_operand.vmem [shape: f32[32,32], index: 5, kind: input, shape index: {}]
  %s6 = inlined_call_operand.vmem [shape: f32[32,1], index: 6, kind: input, shape index: {}]
  %s7 = inlined_call_operand.<no memory space> [shape: f32[1], index: 7, kind: input, shape index: {}]
  %s8 = inlined_call_operand.hbm [shape: f32[2,32,256], index: 8, kind: output, shape index: {}]
  %s9 = sld [smem:[#allocation0]]
  $region69: #{tpu_custom_call.1} parent=0
    _
  %s11 = ssub.s32 1, %s9
  %s12 = scalar_select 0, %s11, %s9
  %13 = sst [smem:[#allocation2]] %s7
  $region1: #{tpu_custom_call.1} parent=0
    #allocation3 [shape = 'u8[65536]{0}', space=vmem, size = 0x10000, scoped, tag = 'input window, operand 0']
    #allocation4 [shape = 's32[2]{0}', space=sflag, size = 0x8, scoped, tag = 'scoped memory for tpu_custom_call.1']
    #allocation5 [shape = 's32[2]{0}', space=sflag, size = 0x8, scoped, tag = 'scoped memory for tpu_custom_call.1']
    #allocation6 [shape = 'u8[65536]{0}', space=vmem, size = 0x10000, scoped, tag = 'output window, operand 0']
    %14 = vsyncpa [#allocation4], 0
    %s15 = scalar_lea.sflag [#allocation4], 1
    %16 = vsyncpa %s15, 0
    %17 = vsyncpa [#allocation5], 0
    %s18 = scalar_lea.sflag [#allocation5], 1
    %19 = vsyncpa %s18, 0
    loop: start=0, step=1, limit=4
    $region2: #{tpu_custom_call.1} parent=1 // loop_pre_header
      _
    $region3: #{tpu_custom_call.1} parent=1 // loop_header
      %s21 = sphi 0, %s25
      %p22 = scmp.ge.s32.totalorder %s21, 4
      %s31 = sphi 0, %s33
      %s34 = sphi 0, %s31
      %s35 = sphi 0, %s34
      %s51 = sphi 0, %s35
      %s55 = sphi 0, %s55
      %s57 = sphi 0, %s55
      %s58 = sphi 0, %s57
      %s72 = sphi 0, %s58
      %s76 = sphi 0, %s76
      %s78 = sphi 0, %s76
      %s79 = sphi 0, %s78
      %s93 = sphi 0, %s79
      %s97 = sphi 0, %s97
      %s99 = sphi 0, %s97
      %s100 = sphi 0, %s99
      %s114 = sphi 0, %s100
      %s118 = sphi 0, %s118
      %s120 = sphi 0, %s118
      %s121 = sphi 0, %s120
      %s135 = sphi 0, %s121
      %s139 = sphi 0, %s139
      %s141 = sphi 0, %s139
      %s142 = sphi 0, %s141
      %s156 = sphi 0, %s142
      %s160 = sphi 0, %s160
      %s162 = sphi 0, %s160
      %s163 = sphi 0, %s162
      %s177 = sphi 0, %s163
      %s181 = sphi 0, %s181
      %s183 = sphi 0, %s181
      %s184 = sphi 0, %s183
      %s198 = sphi 0, %s184
      %s204 = sphi 0, %s206
      %s207 = sphi 0, %s204
      %s208 = sphi 0, %s207
      %s224 = sphi 0, %s208
    $region4: #{tpu_custom_call.1} parent=1 // loop_header_branch
      %24 = sbr.rel (%p22) target = $region8
    $region5: #{tpu_custom_call.1} parent=1 // loop_body
      %s26 = ssub.s32 %s21, 1
      %s27 = ssub.s32 %s21, 2
      %s28 = sadd.s32 %s21, 1
      %s29 = ssub.s32 %s21, %s28
      %p30 = scmp.eq.s32.totalorder %s29, 0
      %s32 = sadd.s32 %s31, 1
      %s33 = scalar_select %p30, %s31, %s32
      %p36 = pneg %p30
      %p37 = scmp.eq.s32.totalorder %s21, 1
      %p38 = por %p36, %p37
      %p39 = scmp.ne.s32.totalorder %s31, %s34
      %p40 = scmp.eq.s32.totalorder %s21, 0
      %p41 = por %p39, %p40
      %p42 = scmp.ne.s32.totalorder %s31, %s34
      %p43 = scmp.eq.s32.totalorder %s26, 1
      %p44 = por %p42, %p43
      %p45 = scmp.ne.s32.totalorder %s34, %s35
      %p46 = scmp.eq.s32.totalorder %s26, 0
      %p47 = por %p45, %p46
      %p48 = scmp.ne.s32.totalorder %s34, %s35
      %p49 = scmp.eq.s32.totalorder %s27, 1
      %p50 = por %p48, %p49
      %p52 = scmp.ne.s32.totalorder %s35, %s51
      %p53 = scmp.eq.s32.totalorder %s27, 0
      %p54 = por %p52, %p53
      %s56 = sadd.s32 %s55, 1
      %p59 = scmp.eq.s32.totalorder %s21, 1
      %p60 = scmp.ne.s32.totalorder %s55, %s57
      %p61 = scmp.eq.s32.totalorder %s21, 0
      %p62 = por %p60, %p61
      %p63 = scmp.ne.s32.totalorder %s55, %s57
      %p64 = scmp.eq.s32.totalorder %s26, 1
      %p65 = por %p63, %p64
      %p66 = scmp.ne.s32.totalorder %s57, %s58
      %p67 = scmp.eq.s32.totalorder %s26, 0
      %p68 = por %p66, %p67
      %p69 = scmp.ne.s32.totalorder %s57, %s58
      %p70 = scmp.eq.s32.totalorder %s27, 1
      %p71 = por %p69, %p70
      %p73 = scmp.ne.s32.totalorder %s58, %s72
      %p74 = scmp.eq.s32.totalorder %s27, 0
      %p75 = por %p73, %p74
      %s77 = sadd.s32 %s76, 1
      %p80 = scmp.eq.s32.totalorder %s21, 1
      %p81 = scmp.ne.s32.totalorder %s76, %s78
      %p82 = scmp.eq.s32.totalorder %s21, 0
      %p83 = por %p81, %p82
      %p84 = scmp.ne.s32.totalorder %s76, %s78
      %p85 = scmp.eq.s32.totalorder %s26, 1
      %p86 = por %p84, %p85
      %p87 = scmp.ne.s32.totalorder %s78, %s79
      %p88 = scmp.eq.s32.totalorder %s26, 0
      %p89 = por %p87, %p88
      %p90 = scmp.ne.s32.totalorder %s78, %s79
      %p91 = scmp.eq.s32.totalorder %s27, 1
      %p92 = por %p90, %p91
      %p94 = scmp.ne.s32.totalorder %s79, %s93
      %p95 = scmp.eq.s32.totalorder %s27, 0
      %p96 = por %p94, %p95
      %s98 = sadd.s32 %s97, 1
      %p101 = scmp.eq.s32.totalorder %s21, 1
      %p102 = scmp.ne.s32.totalorder %s97, %s99
      %p103 = scmp.eq.s32.totalorder %s21, 0
      %p104 = por %p102, %p103
      %p105 = scmp.ne.s32.totalorder %s97, %s99
      %p106 = scmp.eq.s32.totalorder %s26, 1
      %p107 = por %p105, %p106
      %p108 = scmp.ne.s32.totalorder %s99, %s100
      %p109 = scmp.eq.s32.totalorder %s26, 0
      %p110 = por %p108, %p109
      %p111 = scmp.ne.s32.totalorder %s99, %s100
      %p112 = scmp.eq.s32.totalorder %s27, 1
      %p113 = por %p111, %p112
      %p115 = scmp.ne.s32.totalorder %s100, %s114
      %p116 = scmp.eq.s32.totalorder %s27, 0
      %p117 = por %p115, %p116
      %s119 = sadd.s32 %s118, 1
      %p122 = scmp.eq.s32.totalorder %s21, 1
      %p123 = scmp.ne.s32.totalorder %s118, %s120
      %p124 = scmp.eq.s32.totalorder %s21, 0
      %p125 = por %p123, %p124
      %p126 = scmp.ne.s32.totalorder %s118, %s120
      %p127 = scmp.eq.s32.totalorder %s26, 1
      %p128 = por %p126, %p127
      %p129 = scmp.ne.s32.totalorder %s120, %s121
      %p130 = scmp.eq.s32.totalorder %s26, 0
      %p131 = por %p129, %p130
      %p132 = scmp.ne.s32.totalorder %s120, %s121
      %p133 = scmp.eq.s32.totalorder %s27, 1
      %p134 = por %p132, %p133
      %p136 = scmp.ne.s32.totalorder %s121, %s135
      %p137 = scmp.eq.s32.totalorder %s27, 0
      %p138 = por %p136, %p137
      %s140 = sadd.s32 %s139, 1
      %p143 = scmp.eq.s32.totalorder %s21, 1
      %p144 = scmp.ne.s32.totalorder %s139, %s141
      %p145 = scmp.eq.s32.totalorder %s21, 0
      %p146 = por %p144, %p145
      %p147 = scmp.ne.s32.totalorder %s139, %s141
      %p148 = scmp.eq.s32.totalorder %s26, 1
      %p149 = por %p147, %p148
      %p150 = scmp.ne.s32.totalorder %s141, %s142
      %p151 = scmp.eq.s32.totalorder %s26, 0
      %p152 = por %p150, %p151
      %p153 = scmp.ne.s32.totalorder %s141, %s142
      %p154 = scmp.eq.s32.totalorder %s27, 1
      %p155 = por %p153, %p154
      %p157 = scmp.ne.s32.totalorder %s142, %s156
      %p158 = scmp.eq.s32.totalorder %s27, 0
      %p159 = por %p157, %p158
      %s161 = sadd.s32 %s160, 1
      %p164 = scmp.eq.s32.totalorder %s21, 1
      %p165 = scmp.ne.s32.totalorder %s160, %s162
      %p166 = scmp.eq.s32.totalorder %s21, 0
      %p167 = por %p165, %p166
      %p168 = scmp.ne.s32.totalorder %s160, %s162
      %p169 = scmp.eq.s32.totalorder %s26, 1
      %p170 = por %p168, %p169
      %p171 = scmp.ne.s32.totalorder %s162, %s163
      %p172 = scmp.eq.s32.totalorder %s26, 0
      %p173 = por %p171, %p172
      %p174 = scmp.ne.s32.totalorder %s162, %s163
      %p175 = scmp.eq.s32.totalorder %s27, 1
      %p176 = por %p174, %p175
      %p178 = scmp.ne.s32.totalorder %s163, %s177
      %p179 = scmp.eq.s32.totalorder %s27, 0
      %p180 = por %p178, %p179
      %s182 = sadd.s32 %s181, 1
      %p185 = scmp.eq.s32.totalorder %s21, 1
      %p186 = scmp.ne.s32.totalorder %s181, %s183
      %p187 = scmp.eq.s32.totalorder %s21, 0
      %p188 = por %p186, %p187
      %p189 = scmp.ne.s32.totalorder %s181, %s183
      %p190 = scmp.eq.s32.totalorder %s26, 1
      %p191 = por %p189, %p190
      %p192 = scmp.ne.s32.totalorder %s183, %s184
      %p193 = scmp.eq.s32.totalorder %s26, 0
      %p194 = por %p192, %p193
      %p195 = scmp.ne.s32.totalorder %s183, %s184
      %p196 = scmp.eq.s32.totalorder %s27, 1
      %p197 = por %p195, %p196
      %p199 = scmp.ne.s32.totalorder %s184, %s198
      %p200 = scmp.eq.s32.totalorder %s27, 0
      %p201 = por %p199, %p200
      %s202 = ssub.s32 %s21, %s28
      %p203 = scmp.eq.s32.totalorder %s202, 0
      %s205 = sadd.s32 %s204, 1
      %s206 = scalar_select %p203, %s204, %s205
      %p209 = pneg %p203
      %p210 = scmp.eq.s32.totalorder %s21, 1
      %p211 = por %p209, %p210
      %p212 = scmp.ne.s32.totalorder %s204, %s207
      %p213 = scmp.eq.s32.totalorder %s21, 0
      %p214 = por %p212, %p213
      %p215 = scmp.ne.s32.totalorder %s204, %s207
      %p216 = scmp.eq.s32.totalorder %s26, 1
      %p217 = por %p215, %p216
      %p218 = scmp.ne.s32.totalorder %s207, %s208
      %p219 = scmp.eq.s32.totalorder %s26, 0
      %p220 = por %p218, %p219
      %p221 = scmp.ne.s32.totalorder %s207, %s208
      %p222 = scmp.eq.s32.totalorder %s27, 1
      %p223 = por %p221, %p222
      %p225 = scmp.ne.s32.totalorder %s208, %s224
      %p226 = scmp.eq.s32.totalorder %s27, 0
      %p227 = por %p225, %p226
      %p228 = scmp.le.s32.totalorder 1, %s21
      %p229 = scmp.lt.s32.totalorder %s21, 3
      %p230 = pnand %p228, %p229
      %p231 = pneg %p230
      // Predicated region
      $region9: #{tpu_custom_call.1} parent=5 // pred_check
        _
      $region10: #{tpu_custom_call.1} parent=5 // pred_check_branch
        %233 = sbr.rel (%p230) target = $region12
      $region11: #{tpu_custom_call.1} parent=5 // pred_region
        %s234 = ssub.s32 %s21, 1
        // Predicated region
        $region13: #{tpu_custom_call.1} parent=11 // pred_check
          %p235 = pneg %p68
        $region14: #{tpu_custom_call.1} parent=11 // pred_check_branch
          %237 = sbr.rel (%p235) target = $region16
        $region15: #{tpu_custom_call.1} parent=11 // pred_region
          _
        $region16: #{tpu_custom_call.1} parent=11 // pred_fallthru
          _
        // Predicated region
        $region17: #{tpu_custom_call.1} parent=11 // pred_check
          %p238 = pneg %p89
        $region18: #{tpu_custom_call.1} parent=11 // pred_check_branch
          %240 = sbr.rel (%p238) target = $region20
        $region19: #{tpu_custom_call.1} parent=11 // pred_region
          _
        $region20: #{tpu_custom_call.1} parent=11 // pred_fallthru
          _
        // Predicated region
        $region21: #{tpu_custom_call.1} parent=11 // pred_check
          %p241 = pneg %p110
        $region22: #{tpu_custom_call.1} parent=11 // pred_check_branch
          %243 = sbr.rel (%p241) target = $region24
        $region23: #{tpu_custom_call.1} parent=11 // pred_region
          _
        $region24: #{tpu_custom_call.1} parent=11 // pred_fallthru
          _
        // Predicated region
        $region25: #{tpu_custom_call.1} parent=11 // pred_check
          %p244 = pneg %p131
        $region26: #{tpu_custom_call.1} parent=11 // pred_check_branch
          %246 = sbr.rel (%p244) target = $region28
        $region27: #{tpu_custom_call.1} parent=11 // pred_region
          _
        $region28: #{tpu_custom_call.1} parent=11 // pred_fallthru
          _
        // Predicated region
        $region29: #{tpu_custom_call.1} parent=11 // pred_check
          %p247 = pneg %p152
        $region30: #{tpu_custom_call.1} parent=11 // pred_check_branch
          %249 = sbr.rel (%p247) target = $region32
        $region31: #{tpu_custom_call.1} parent=11 // pred_region
          _
        $region32: #{tpu_custom_call.1} parent=11 // pred_fallthru
          _
        // Predicated region
        $region33: #{tpu_custom_call.1} parent=11 // pred_check
          %p250 = pneg %p173
        $region34: #{tpu_custom_call.1} parent=11 // pred_check_branch
          %252 = sbr.rel (%p250) target = $region36
        $region35: #{tpu_custom_call.1} parent=11 // pred_region
          _
        $region36: #{tpu_custom_call.1} parent=11 // pred_fallthru
          _
        // Predicated region
        $region37: #{tpu_custom_call.1} parent=11 // pred_check
          %p253 = pneg %p194
        $region38: #{tpu_custom_call.1} parent=11 // pred_check_branch
          %255 = sbr.rel (%p253) target = $region40
        $region39: #{tpu_custom_call.1} parent=11 // pred_region
          _
        $region40: #{tpu_custom_call.1} parent=11 // pred_fallthru
          _
      $region12: #{tpu_custom_call.1} parent=5 // pred_fallthru
        _
      %p256 = scmp.lt.s32.totalorder %s21, 2
      // Predicated region
      $region41: #{tpu_custom_call.1} parent=5 // pred_check
        %p257 = pneg %p256
      $region42: #{tpu_custom_call.1} parent=5 // pred_check_branch
        %259 = sbr.rel (%p257) target = $region44
      $region43: #{tpu_custom_call.1} parent=5 // pred_region
        // Predicated region
        $region45: #{tpu_custom_call.1} parent=43 // pred_check
          %p260 = pneg %p41
        $region46: #{tpu_custom_call.1} parent=43 // pred_check_branch
          %262 = sbr.rel (%p260) target = $region48
        $region47: #{tpu_custom_call.1} parent=43 // pred_region
          %s263 = sand.u32 %s31, 1
          %s264 = scalar_lea.sflag [#allocation4], %s263
          %s265 = sand.u32 %s31, 1
          %s266 = smul.addr %s265, 64
          %s267 = scalar_lea.vmem [#allocation3], %s266
          %269 = vsyncadd %s264, 0
          %s270 = smul.addr %s21, 8
          %s271 = smul.addr %s270, 8
          %s272 = scalar_lea.hbm %s0, %s271
          %s273 = sshll.u32 %s272, 4
          %s274 = int_to_ptr.hbm [resolvable:$true] %s273
          %s275 = sshll.u32 %s267, 4
          %s276 = int_to_ptr.vmem [resolvable:$true] %s275
          %281 = dma.hbm_to_vmem [thread:$0]  %s274, 1024, %s276, %s264, 256, 256, 16
        $region48: #{tpu_custom_call.1} parent=43 // pred_fallthru
          _
      $region44: #{tpu_custom_call.1} parent=5 // pred_fallthru
        _
      %p282 = scmp.le.s32.totalorder 1, %s21
      %p283 = scmp.lt.s32.totalorder %s21, 3
      %p284 = pnand %p282, %p283
      %p285 = pneg %p284
      // Predicated region
      $region49: #{tpu_custom_call.1} parent=5 // pred_check
        _
      $region50: #{tpu_custom_call.1} parent=5 // pred_check_branch
        %287 = sbr.rel (%p284) target = $region52
      $region51: #{tpu_custom_call.1} parent=5 // pred_region
        %s288 = ssub.s32 %s21, 1
        %s289 = sand.u32 %s34, 1
        %s290 = scalar_lea.sflag [#allocation4], %s289
        %s291 = sand.u32 %s34, 1
        %s292 = smul.addr %s291, 64
        %s293 = scalar_lea.vmem [#allocation3], %s292
        // Predicated region
        $region53: #{tpu_custom_call.1} parent=51 // pred_check
          %p294 = pneg %p47
        $region54: #{tpu_custom_call.1} parent=51 // pred_check_branch
          %296 = sbr.rel (%p294) target = $region56
        $region55: #{tpu_custom_call.1} parent=51 // pred_region
          %298 = dma.done %s290, 1024
        $region56: #{tpu_custom_call.1} parent=51 // pred_fallthru
          _
        %s299 = sand.u32 %s34, 1
        %s300 = scalar_lea.sflag [#allocation4], %s299
        %s301 = sand.u32 %s34, 1
        %s302 = smul.addr %s301, 64
        %s303 = scalar_lea.vmem [#allocation3], %s302
        %p304 = pneg %p47
        %p305 = pneg %p44
        %p306 = pneg %p68
        %p307 = pneg %p65
        %p308 = pneg %p89
        %p309 = pneg %p86
        %p310 = pneg %p110
        %p311 = pneg %p107
        %p312 = pneg %p131
        %p313 = pneg %p128
        %p314 = pneg %p152
        %p315 = pneg %p149
        %p316 = pneg %p173
        %p317 = pneg %p170
        %p318 = pneg %p194
        %p319 = pneg %p191
        %p320 = pneg %p220
        %p321 = pneg %p217
        %s322 = sand.u32 %s207, 1
        %s323 = scalar_lea.sflag [#allocation5], %s322
        %s324 = sand.u32 %s207, 1
        %s325 = smul.addr %s324, 64
        %s326 = scalar_lea.vmem [#allocation6], %s325
        %v327 = vld [vmem:[%s293] sm:$0xff]
        %v328 = vld [vmem:[%s293 + $0x8] sm:$0xff]
        %v329 = vld [vmem:[%s293 + $0x10] sm:$0xff]
        %v330 = vld [vmem:[%s293 + $0x18] sm:$0xff]
        %v331 = vld [vmem:[%s293 + $0x20] sm:$0xff]
        %v332 = vld [vmem:[%s293 + $0x28] sm:$0xff]
        %v333 = vld [vmem:[%s293 + $0x30] sm:$0xff]
        %v334 = vld [vmem:[%s293 + $0x38] sm:$0xff]
        %v335 = vld [vmem:[%s3] sm:$0xf]
        %v336 = vld [vmem:[%s4] sm:$0xf]
        %338 = vset.pattern.permute.xlu0 0
        %339 = vperm.xlu0 %338, %v336
        %v340 = vpop.permute.xlu0 %339
        %vm342 = vcmask 261120
        %v344 = vsel %vm342, %v335, 0
        %346 = vmatpush.msra.mxu0 0.0
        %347 = vmatpush.msra.mxu0 0.0
        %348 = vmatpush.msra.mxu0 0.0
        %349 = vmatpush.msra.mxu0 0.0
        %350 = vmatpush.msra.mxu0 0.0
        %351 = vmatpush.msra.mxu0 0.0
        %352 = vmatpush.msra.mxu0 0.0
        %353 = vmatpush.msra.mxu0 0.0
        %354 = vmatpush.msra.mxu0 0.0
        %355 = vmatpush.msra.mxu0 0.0
        %356 = vmatpush.msra.mxu0 0.0
        %357 = vmatpush.msra.mxu0 0.0
        %358 = vmatpush.msra.mxu0 %v333
        %359 = vmatpush.msra.mxu0 %v331
        %360 = vmatpush.msra.mxu0 %v329
        %361 = vmatpush.msra.mxu0 %v327
        %362 = vmatmul.f32.gmra.mxu0 %v344
        %v363 = vpop.f32.mrf.mxu0
        %v364 = vadd.f32 %v340, %v363
        %365 = vdwg.mxu0
        %366 = vmatpush.msra.mxu0 0.0
        %367 = vmatpush.msra.mxu0 0.0
        %368 = vmatpush.msra.mxu0 0.0
        %369 = vmatpush.msra.mxu0 0.0
        %370 = vmatpush.msra.mxu0 0.0
        %371 = vmatpush.msra.mxu0 0.0
        %372 = vmatpush.msra.mxu0 0.0
        %373 = vmatpush.msra.mxu0 0.0
        %374 = vmatpush.msra.mxu0 0.0
        %375 = vmatpush.msra.mxu0 0.0
        %376 = vmatpush.msra.mxu0 0.0
        %377 = vmatpush.msra.mxu0 0.0
        %378 = vmatpush.msra.mxu0 %v334
        %379 = vmatpush.msra.mxu0 %v332
        %380 = vmatpush.msra.mxu0 %v330
        %381 = vmatpush.msra.mxu0 %v328
        %382 = vmatmul.f32.gmra.mxu0 %v344
        %v383 = vpop.f32.mrf.mxu0
        %v384 = vadd.f32 %v340, %v383
        %385 = vdwg.mxu0
        %vm386 = vcmask 1043456
        %v387 = vsel %vm386, %v364, -inf
        %v388 = vsel %vm386, %v384, -inf
        %v389 = vmax.f32 %v387, %v388
        %390 = vmax.xlane.f32.xlu0 %v389
        %v391 = vpop.xlane.xlu0 %390
        %v392 = vsub.f32 %v364, %v391
        %v393 = vsub.f32 %v384, %v391
        %v394 = vmul.f32 %v392, 1.442695
        %v395 = vpow.pop %v394
        %v396 = vmul.f32 %v393, 1.442695
        %v397 = vpow.pop %v396
        %v398 = vsel %vm386, %v395, 0.0
        %v399 = vsel %vm386, %v397, 0.0
        %v400 = vadd.f32 %v398, %v399
        %401 = vadd.xlane.f32.xlu0 %v400
        %v402 = vpop.xlane.xlu0 %401
        %v403 = vrcp.pop %v402
        %v404 = vmul.f32 %v402, %v403
        %v405 = vsub.f32 1.0, %v404
        %v406 = vmul.f32 %v403, %v405
        %v407 = vadd.f32 %v403, %v406
        %vm408 = vweird.f32 %v402
        %vm409 = vweird.f32 %v403
        %vm410 = vmor %vm408, %vm409
        %v411 = vsel %vm410, %v403, %v407
        %v412 = vand.u32 2147483647, %v402
        %vm413 = vcmp.eq.f32.partialorder %v412, 8.507059e+37
        %v414 = vand.u32 %v402, 2147483648
        %v415 = vor.u32 1.1754944e-38, %v414
        %v416 = vsel %vm413, %v415, %v411
        %v417 = vmul.f32 %v395, %v416
        %v418 = vmul.f32 %v397, %v416
        %v419 = vld [vmem:[%s5] sm:$0xff]
        %v420 = vld [vmem:[%s5 + $0x8] sm:$0xff]
        %v421 = vld [vmem:[%s5 + $0x10] sm:$0xff]
        %v422 = vld [vmem:[%s5 + $0x18] sm:$0xff]
        %v423 = vld [vmem:[%s6] sm:$0xff]
        %v424 = vld [vmem:[%s6 + $0x8] sm:$0xff]
        %v425 = vld [vmem:[%s6 + $0x10] sm:$0xff]
        %v426 = vld [vmem:[%s6 + $0x18] sm:$0xff]
        %428 = vset.pattern.permute.xlu0 0
        %429 = vperm.xlu0 %428, %v423
        %v430 = vpop.permute.xlu0 %429
        %433 = vset.pattern.permute.xlu0 0
        %434 = vperm.xlu0 %433, %v424
        %v435 = vpop.permute.xlu0 %434
        %438 = vset.pattern.permute.xlu0 0
        %439 = vperm.xlu0 %438, %v425
        %v440 = vpop.permute.xlu0 %439
        %443 = vset.pattern.permute.xlu0 0
        %444 = vperm.xlu0 %443, %v426
        %v445 = vpop.permute.xlu0 %444
        %v448 = vsel %vm342, %v419, 0
        %v451 = vsel %vm342, %v420, 0
        %v454 = vsel %vm342, %v421, 0
        %v457 = vsel %vm342, %v422, 0
        %459 = vmatpush.msra.mxu0 0.0
        %460 = vmatpush.msra.mxu0 0.0
        %461 = vmatpush.msra.mxu0 0.0
        %462 = vmatpush.msra.mxu0 0.0
        %463 = vmatpush.msra.mxu0 0.0
        %464 = vmatpush.msra.mxu0 0.0
        %465 = vmatpush.msra.mxu0 0.0
        %466 = vmatpush.msra.mxu0 0.0
        %467 = vmatpush.msra.mxu0 0.0
        %468 = vmatpush.msra.mxu0 0.0
        %469 = vmatpush.msra.mxu0 0.0
        %470 = vmatpush.msra.mxu0 0.0
        %471 = vmatpush.msra.mxu0 %v333
        %472 = vmatpush.msra.mxu0 %v331
        %473 = vmatpush.msra.mxu0 %v329
        %474 = vmatpush.msra.mxu0 %v327
        %475 = vmatmul.f32.gmra.mxu0 %v448
        %v476 = vpop.f32.mrf.mxu0
        %v477 = vadd.f32 %v430, %v476
        %478 = vmatmul.f32.gmra.mxu0 %v451
        %v479 = vpop.f32.mrf.mxu0
        %v480 = vadd.f32 %v435, %v479
        %481 = vmatmul.f32.gmra.mxu0 %v454
        %v482 = vpop.f32.mrf.mxu0
        %v483 = vadd.f32 %v440, %v482
        %484 = vmatmul.f32.gmra.mxu0 %v457
        %v485 = vpop.f32.mrf.mxu0
        %v486 = vadd.f32 %v445, %v485
        %487 = vdwg.mxu0
        %488 = vmatpush.msra.mxu0 0.0
        %489 = vmatpush.msra.mxu0 0.0
        %490 = vmatpush.msra.mxu0 0.0
        %491 = vmatpush.msra.mxu0 0.0
        %492 = vmatpush.msra.mxu0 0.0
        %493 = vmatpush.msra.mxu0 0.0
        %494 = vmatpush.msra.mxu0 0.0
        %495 = vmatpush.msra.mxu0 0.0
        %496 = vmatpush.msra.mxu0 0.0
        %497 = vmatpush.msra.mxu0 0.0
        %498 = vmatpush.msra.mxu0 0.0
        %499 = vmatpush.msra.mxu0 0.0
        %500 = vmatpush.msra.mxu0 %v334
        %501 = vmatpush.msra.mxu0 %v332
        %502 = vmatpush.msra.mxu0 %v330
        %503 = vmatpush.msra.mxu0 %v328
        %504 = vmatmul.f32.gmra.mxu0 %v448
        %v505 = vpop.f32.mrf.mxu0
        %v506 = vadd.f32 %v430, %v505
        %507 = vmatmul.f32.gmra.mxu0 %v451
        %v508 = vpop.f32.mrf.mxu0
        %v509 = vadd.f32 %v435, %v508
        %510 = vmatmul.f32.gmra.mxu0 %v454
        %v511 = vpop.f32.mrf.mxu0
        %v512 = vadd.f32 %v440, %v511
        %513 = vmatmul.f32.gmra.mxu0 %v457
        %v514 = vpop.f32.mrf.mxu0
        %v515 = vadd.f32 %v445, %v514
        %516 = vdwg.mxu0
        %517 = vmatpush.xpose.msra.mxu0 0.0
        %518 = vmatpush.xpose.msra.mxu0 0.0
        %519 = vmatpush.xpose.msra.mxu0 0.0
        %520 = vmatpush.xpose.msra.mxu0 0.0
        %521 = vmatpush.xpose.msra.mxu0 0.0
        %522 = vmatpush.xpose.msra.mxu0 0.0
        %523 = vmatpush.xpose.msra.mxu0 0.0
        %524 = vmatpush.xpose.msra.mxu0 0.0
        %525 = vmatpush.xpose.msra.mxu0 0.0
        %526 = vmatpush.xpose.msra.mxu0 0.0
        %527 = vmatpush.xpose.msra.mxu0 0.0
        %528 = vmatpush.xpose.msra.mxu0 0.0
        %529 = vmatpush.xpose.msra.mxu0 %v486
        %530 = vmatpush.xpose.msra.mxu0 %v483
        %531 = vmatpush.xpose.msra.mxu0 %v480
        %532 = vmatpush.xpose.msra.mxu0 %v477
        %533 = vmatmul.f32.gmra.mxu0 %v417
        %v534 = vpop.f32.mrf.mxu0
        %v535 = vadd.f32 0.0, %v534
        %536 = vdwg.mxu0
        %537 = vmatpush.xpose.msra.mxu0 0.0
        %538 = vmatpush.xpose.msra.mxu0 0.0
        %539 = vmatpush.xpose.msra.mxu0 0.0
        %540 = vmatpush.xpose.msra.mxu0 0.0
        %541 = vmatpush.xpose.msra.mxu0 0.0
        %542 = vmatpush.xpose.msra.mxu0 0.0
        %543 = vmatpush.xpose.msra.mxu0 0.0
        %544 = vmatpush.xpose.msra.mxu0 0.0
        %545 = vmatpush.xpose.msra.mxu0 0.0
        %546 = vmatpush.xpose.msra.mxu0 0.0
        %547 = vmatpush.xpose.msra.mxu0 0.0
        %548 = vmatpush.xpose.msra.mxu0 0.0
        %549 = vmatpush.xpose.msra.mxu0 %v515
        %550 = vmatpush.xpose.msra.mxu0 %v512
        %551 = vmatpush.xpose.msra.mxu0 %v509
        %552 = vmatpush.xpose.msra.mxu0 %v506
        %553 = vmatmul.f32.gmra.mxu0 %v418
        %v554 = vpop.f32.mrf.mxu0
        %v555 = vadd.f32 %v535, %v554
        %556 = vdwg.mxu0
        %v557 = vld [vmem:[%s1] sm:$0xf]
        %v558 = vld [vmem:[%s2] sm:$0xf]
        %560 = vset.pattern.permute.xlu0 0
        %561 = vperm.xlu0 %560, %v558
        %v562 = vpop.permute.xlu0 %561
        %v565 = vsel %vm342, %v557, 0
        %567 = vmatpush.msra.mxu0 0.0
        %568 = vmatpush.msra.mxu0 0.0
        %569 = vmatpush.msra.mxu0 0.0
        %570 = vmatpush.msra.mxu0 0.0
        %571 = vmatpush.msra.mxu0 0.0
        %572 = vmatpush.msra.mxu0 0.0
        %573 = vmatpush.msra.mxu0 0.0
        %574 = vmatpush.msra.mxu0 0.0
        %575 = vmatpush.msra.mxu0 0.0
        %576 = vmatpush.msra.mxu0 0.0
        %577 = vmatpush.msra.mxu0 0.0
        %578 = vmatpush.msra.mxu0 0.0
        %579 = vmatpush.msra.mxu0 %v333
        %580 = vmatpush.msra.mxu0 %v331
        %581 = vmatpush.msra.mxu0 %v329
        %582 = vmatpush.msra.mxu0 %v327
        %583 = vmatmul.f32.gmra.mxu0 %v565
        %v584 = vpop.f32.mrf.mxu0
        %v585 = vadd.f32 %v562, %v584
        %586 = vdwg.mxu0
        %587 = vmatpush.msra.mxu0 0.0
        %588 = vmatpush.msra.mxu0 0.0
        %589 = vmatpush.msra.mxu0 0.0
        %590 = vmatpush.msra.mxu0 0.0
        %591 = vmatpush.msra.mxu0 0.0
        %592 = vmatpush.msra.mxu0 0.0
        %593 = vmatpush.msra.mxu0 0.0
        %594 = vmatpush.msra.mxu0 0.0
        %595 = vmatpush.msra.mxu0 0.0
        %596 = vmatpush.msra.mxu0 0.0
        %597 = vmatpush.msra.mxu0 0.0
        %598 = vmatpush.msra.mxu0 0.0
        %599 = vmatpush.msra.mxu0 %v334
        %600 = vmatpush.msra.mxu0 %v332
        %601 = vmatpush.msra.mxu0 %v330
        %602 = vmatpush.msra.mxu0 %v328
        %603 = vmatmul.f32.gmra.mxu0 %v565
        %v604 = vpop.f32.mrf.mxu0
        %v605 = vadd.f32 %v562, %v604
        %606 = vdwg.mxu0
        %v607 = vsel %vm386, %v585, -inf
        %v608 = vrot.slane %v607, 4
        %v609 = vmax.f32 %v607, %v608
        %v610 = vrot.slane %v609, 2
        %v611 = vmax.f32 %v609, %v610
        %v612 = vrot.slane %v611, 1
        %v613 = vmax.f32 %v611, %v612
        %v614 = vsel %vm386, %v605, -inf
        %v615 = vrot.slane %v614, 4
        %v616 = vmax.f32 %v614, %v615
        %v617 = vrot.slane %v616, 2
        %v618 = vmax.f32 %v616, %v617
        %v619 = vrot.slane %v618, 1
        %v620 = vmax.f32 %v618, %v619
        %v621 = vsub.f32 %v585, %v613
        %v622 = vsub.f32 %v605, %v620
        %v623 = vmul.f32 %v621, 1.442695
        %v624 = vpow.pop %v623
        %v625 = vmul.f32 %v622, 1.442695
        %v626 = vpow.pop %v625
        %v627 = vsel %vm386, %v624, 0.0
        %v628 = vrot.slane %v627, 4
        %v629 = vadd.f32 %v627, %v628
        %v630 = vrot.slane %v629, 2
        %v631 = vadd.f32 %v629, %v630
        %v632 = vrot.slane %v631, 1
        %v633 = vadd.f32 %v631, %v632
        %v634 = vsel %vm386, %v626, 0.0
        %v635 = vrot.slane %v634, 4
        %v636 = vadd.f32 %v634, %v635
        %v637 = vrot.slane %v636, 2
        %v638 = vadd.f32 %v636, %v637
        %v639 = vrot.slane %v638, 1
        %v640 = vadd.f32 %v638, %v639
        %v641 = vrcp.pop %v633
        %v642 = vmul.f32 %v633, %v641
        %v643 = vsub.f32 1.0, %v642
        %v644 = vmul.f32 %v641, %v643
        %v645 = vadd.f32 %v641, %v644
        %vm646 = vweird.f32 %v633
        %vm647 = vweird.f32 %v641
        %vm648 = vmor %vm646, %vm647
        %v649 = vsel %vm648, %v641, %v645
        %v650 = vand.u32 2147483647, %v633
        %vm651 = vcmp.eq.f32.partialorder %v650, 8.507059e+37
        %v652 = vand.u32 %v633, 2147483648
        %v653 = vor.u32 1.1754944e-38, %v652
        %v654 = vsel %vm651, %v653, %v649
        %v655 = vrcp.pop %v640
        %v656 = vmul.f32 %v640, %v655
        %v657 = vsub.f32 1.0, %v656
        %v658 = vmul.f32 %v655, %v657
        %v659 = vadd.f32 %v655, %v658
        %vm660 = vweird.f32 %v640
        %vm661 = vweird.f32 %v655
        %vm662 = vmor %vm660, %vm661
        %v663 = vsel %vm662, %v655, %v659
        %v664 = vand.u32 2147483647, %v640
        %vm665 = vcmp.eq.f32.partialorder %v664, 8.507059e+37
        %v666 = vand.u32 %v640, 2147483648
        %v667 = vor.u32 1.1754944e-38, %v666
        %v668 = vsel %vm665, %v667, %v663
        %v669 = vmul.f32 %v624, %v654
        %v670 = vmul.f32 %v626, %v668
        %671 = vxpose.xlu0.b32.start [1/16] %v555, 128
        %672 = vxpose.xlu0.b32.cont [2/16] 0.0, 128
        %673 = vxpose.xlu0.b32.cont [3/16] 0.0, 128
        %674 = vxpose.xlu0.b32.cont [4/16] 0.0, 128
        %675 = vxpose.xlu0.b32.cont [5/16] 0.0, 128
        %676 = vxpose.xlu0.b32.cont [6/16] 0.0, 128
        %677 = vxpose.xlu0.b32.cont [7/16] 0.0, 128
        %678 = vxpose.xlu0.b32.cont [8/16] 0.0, 128
        %679 = vxpose.xlu0.b32.cont [9/16] 0.0, 128
        %680 = vxpose.xlu0.b32.cont [10/16] 0.0, 128
        %681 = vxpose.xlu0.b32.cont [11/16] 0.0, 128
        %682 = vxpose.xlu0.b32.cont [12/16] 0.0, 128
        %683 = vxpose.xlu0.b32.cont [13/16] 0.0, 128
        %684 = vxpose.xlu0.b32.cont [14/16] 0.0, 128
        %685 = vxpose.xlu0.b32.cont [15/16] 0.0, 128
        %686 = vxpose.xlu0.b32.end [16/16] 0.0, 128
        %v687 = vpop.trf.xlu0
        %v688 = vpop.trf.xlu0
        %v689 = vpop.trf.xlu0
        %v690 = vpop.trf.xlu0
        %v691 = vpop.trf.xlu0
        %v692 = vpop.trf.xlu0
        %v693 = vpop.trf.xlu0
        %v694 = vpop.trf.xlu0
        %v695 = vpop.trf.xlu0
        %v696 = vpop.trf.xlu0
        %v697 = vpop.trf.xlu0
        %v698 = vpop.trf.xlu0
        %v699 = vpop.trf.xlu0
        %v700 = vpop.trf.xlu0
        %v701 = vpop.trf.xlu0
        %v702 = vpop.trf.xlu0
        %vm703 = vcmask 31744
        %v705 = vsel %vm703, %v687, 0
        %v708 = vsel %vm703, %v688, 0
        %v711 = vsel %vm703, %v689, 0
        %v714 = vsel %vm703, %v690, 0
        %v717 = vsel %vm386, %v669, 0
        %v720 = vsel %vm386, %v670, 0
        %722 = vmatpush.msra.mxu0 0.0
        %723 = vmatpush.msra.mxu0 0.0
        %724 = vmatpush.msra.mxu0 0.0
        %725 = vmatpush.msra.mxu0 0.0
        %726 = vmatpush.msra.mxu0 0.0
        %727 = vmatpush.msra.mxu0 0.0
        %728 = vmatpush.msra.mxu0 0.0
        %729 = vmatpush.msra.mxu0 0.0
        %730 = vmatpush.msra.mxu0 0.0
        %731 = vmatpush.msra.mxu0 0.0
        %732 = vmatpush.msra.mxu0 0.0
        %733 = vmatpush.msra.mxu0 0.0
        %734 = vmatpush.msra.mxu0 0.0
        %735 = vmatpush.msra.mxu0 0.0
        %736 = vmatpush.msra.mxu0 0.0
        %737 = vmatpush.msra.mxu0 %v717
        %738 = vmatmul.f32.gmra.mxu0 %v705
        %v739 = vpop.f32.mrf.mxu0
        %v740 = vadd.f32 0.0, %v739
        %741 = vmatmul.f32.gmra.mxu0 %v708
        %v742 = vpop.f32.mrf.mxu0
        %v743 = vadd.f32 0.0, %v742
        %744 = vmatmul.f32.gmra.mxu0 %v711
        %v745 = vpop.f32.mrf.mxu0
        %v746 = vadd.f32 0.0, %v745
        %747 = vmatmul.f32.gmra.mxu0 %v714
        %v748 = vpop.f32.mrf.mxu0
        %v749 = vadd.f32 0.0, %v748
        %750 = vdwg.mxu0
        %751 = vmatpush.msra.mxu0 0.0
        %752 = vmatpush.msra.mxu0 0.0
        %753 = vmatpush.msra.mxu0 0.0
        %754 = vmatpush.msra.mxu0 0.0
        %755 = vmatpush.msra.mxu0 0.0
        %756 = vmatpush.msra.mxu0 0.0
        %757 = vmatpush.msra.mxu0 0.0
        %758 = vmatpush.msra.mxu0 0.0
        %759 = vmatpush.msra.mxu0 0.0
        %760 = vmatpush.msra.mxu0 0.0
        %761 = vmatpush.msra.mxu0 0.0
        %762 = vmatpush.msra.mxu0 0.0
        %763 = vmatpush.msra.mxu0 0.0
        %764 = vmatpush.msra.mxu0 0.0
        %765 = vmatpush.msra.mxu0 0.0
        %766 = vmatpush.msra.mxu0 %v720
        %767 = vmatmul.f32.gmra.mxu0 %v705
        %v768 = vpop.f32.mrf.mxu0
        %v769 = vadd.f32 0.0, %v768
        %770 = vmatmul.f32.gmra.mxu0 %v708
        %v771 = vpop.f32.mrf.mxu0
        %v772 = vadd.f32 0.0, %v771
        %773 = vmatmul.f32.gmra.mxu0 %v711
        %v774 = vpop.f32.mrf.mxu0
        %v775 = vadd.f32 0.0, %v774
        %776 = vmatmul.f32.gmra.mxu0 %v714
        %v777 = vpop.f32.mrf.mxu0
        %v778 = vadd.f32 0.0, %v777
        %779 = vdwg.mxu0
        %s780 = sld [smem:[#allocation2]]
        %v781 = vstv %s780
        %v782 = vmul.f32 %v781, %v740
        %v783 = vmul.f32 %v781, %v769
        %v784 = vmul.f32 %v781, %v743
        %v785 = vmul.f32 %v781, %v772
        %v786 = vmul.f32 %v781, %v746
        %v787 = vmul.f32 %v781, %v775
        %v788 = vmul.f32 %v781, %v749
        %v789 = vmul.f32 %v781, %v778
        %v790 = vadd.f32 %v782, %v327
        %v791 = vadd.f32 %v783, %v328
        %v792 = vadd.f32 %v784, %v329
        %v793 = vadd.f32 %v785, %v330
        %v794 = vadd.f32 %v786, %v331
        %v795 = vadd.f32 %v787, %v332
        %v796 = vadd.f32 %v788, %v333
        %v797 = vadd.f32 %v789, %v334
        %798 = vst [vmem:[%s326] sm:$0xff] %v790
        %799 = vst [vmem:[%s326 + $0x8] sm:$0xff] %v791
        %800 = vst [vmem:[%s326 + $0x10] sm:$0xff] %v792
        %801 = vst [vmem:[%s326 + $0x18] sm:$0xff] %v793
        %802 = vst [vmem:[%s326 + $0x20] sm:$0xff] %v794
        %803 = vst [vmem:[%s326 + $0x28] sm:$0xff] %v795
        %804 = vst [vmem:[%s326 + $0x30] sm:$0xff] %v796
        %805 = vst [vmem:[%s326 + $0x38] sm:$0xff] %v797
        %s806 = sand.u32 %s207, 1
        %s807 = scalar_lea.sflag [#allocation5], %s806
        %s808 = sand.u32 %s207, 1
        %s809 = smul.addr %s808, 64
        %s810 = scalar_lea.vmem [#allocation6], %s809
        // Predicated region
        $region57: #{tpu_custom_call.1} parent=51 // pred_check
          %p811 = pneg %p217
        $region58: #{tpu_custom_call.1} parent=51 // pred_check_branch
          %813 = sbr.rel (%p811) target = $region60
        $region59: #{tpu_custom_call.1} parent=51 // pred_region
          %815 = vsyncadd %s807, 0
          %s816 = smul.addr %s26, 8
          %s817 = smul.addr %s816, 8
          %s818 = scalar_lea.hbm %s8, %s817
          %s819 = sshll.u32 %s810, 4
          %s820 = int_to_ptr.vmem [resolvable:$true] %s819
          %s821 = sshll.u32 %s818, 4
          %s822 = int_to_ptr.hbm [resolvable:$true] %s821
          %827 = dma.vmem_to_hbm [thread:$0]  %s820, 1024, %s822, %s807, 256, 256, 16
        $region60: #{tpu_custom_call.1} parent=51 // pred_fallthru
          _
      $region52: #{tpu_custom_call.1} parent=5 // pred_fallthru
        _
      %p828 = scmp.le.s32.totalorder 2, %s21
      // Predicated region
      $region61: #{tpu_custom_call.1} parent=5 // pred_check
        %p829 = pneg %p828
      $region62: #{tpu_custom_call.1} parent=5 // pred_check_branch
        %831 = sbr.rel (%p829) target = $region64
      $region63: #{tpu_custom_call.1} parent=5 // pred_region
        %s832 = ssub.s32 %s21, 2
        // Predicated region
        $region65: #{tpu_custom_call.1} parent=63 // pred_check
          %p833 = pneg %p223
        $region66: #{tpu_custom_call.1} parent=63 // pred_check_branch
          %835 = sbr.rel (%p833) target = $region68
        $region67: #{tpu_custom_call.1} parent=63 // pred_region
          %s836 = sand.u32 %s208, 1
          %s837 = scalar_lea.sflag [#allocation5], %s836
          %s838 = sand.u32 %s208, 1
          %s839 = smul.addr %s838, 64
          %s840 = scalar_lea.vmem [#allocation6], %s839
          %842 = dma.done %s837, 1024
        $region68: #{tpu_custom_call.1} parent=63 // pred_fallthru
          _
      $region64: #{tpu_custom_call.1} parent=5 // pred_fallthru
        _
    $region6: #{tpu_custom_call.1} parent=1 // loop_footer
      %s25 = sadd.s32 1, %s21
    $region7: #{tpu_custom_call.1} parent=1 // loop_footer_branch
      %20 = sbr.rel target = $region3
    $region8: #{tpu_custom_call.1} parent=1 // loop_exit
      _
    %843 = vsyncpa [#allocation4], 1
    %s844 = scalar_lea.sflag [#allocation4], 1
    %845 = vsyncpa %s844, 1
    %846 = vsyncpa [#allocation5], 1
    %s847 = scalar_lea.sflag [#allocation5], 1
    %848 = vsyncpa %s847, 1

</llo_original>
